<compile_context>
chip_gen: v7x
topology: tpu7x:2x2x1
jax: 0.10.0
libtpu: 0.0.40
codegen_flags: <defaults>
</compile_context>

<pallas_src>
import functools

import jax
import jax.numpy as jnp
from jax.experimental import pallas as pl
from jax.experimental.pallas import tpu as pltpu

NUM_NODES = (256, 128, 64)
D_ASV = 192                    # speaker-embedding dim (x2)
D_CM = 160                     # countermeasure-embedding dim
IN_DIM = 2 * D_ASV + D_CM      # 544
OUT_DIM = 2
OUT_PAD = 8                    # small padded output slab (writes 32 B/row)
NEG_SLOPE = 0.3

# Batch tile: the single biggest perf lever (amortizes the ~0.35 us per-grid-
# step pipeline overhead).  Recommended per generation:
#   v7x: 2048    v6e: 1024    v5e: 512-1024 (or raise vmem_limit_bytes).
DEFAULT_TILE_B = 1024
ALIGN = 16                     # sublane alignment valid for both f32 and bf16


def _leaky_relu(x, slope=NEG_SLOPE):
    return jnp.where(x > 0, x, slope * x)


def _round_up(n, m):
    return ((n + m - 1) // m) * m


def baseline2_kernel(x1_ref, x2_ref, x3_ref,
                     w1a_ref, w1b_ref, w1c_ref, b1_ref,
                     w2_ref, b2_ref,
                     w3_ref, b3_ref,
                     w4_ref,
                     o_ref):
    # x1/x2/x3: (TILE_B, 192/192/160) tiles; weights (in, out); biases (1, out).
    wdt = w2_ref.dtype  # compute/storage dtype of the weights (f32 or bf16)

    # Layer 1: split-K over the three concatenated feature blocks.
    h = jnp.dot(x1_ref[...], w1a_ref[...], preferred_element_type=jnp.float32)
    h = h + jnp.dot(x2_ref[...], w1b_ref[...], preferred_element_type=jnp.float32)
    h = h + jnp.dot(x3_ref[...], w1c_ref[...], preferred_element_type=jnp.float32)
    h = _leaky_relu(h + b1_ref[...].astype(jnp.float32))

    # Layer 2
    h = _leaky_relu(
        jnp.dot(h.astype(wdt), w2_ref[...], preferred_element_type=jnp.float32)
        + b2_ref[...].astype(jnp.float32))
    # Layer 3
    h = _leaky_relu(
        jnp.dot(h.astype(wdt), w3_ref[...], preferred_element_type=jnp.float32)
        + b3_ref[...].astype(jnp.float32))
    # Output layer (no bias); w4 is zero-padded to OUT_PAD lanes.
    o_ref[...] = jnp.dot(h.astype(wdt), w4_ref[...],
                         preferred_element_type=jnp.float32)


def prepare_params(params, dtype=jnp.float32):
    """One-time weight preparation (hoisted out of the per-call path).

    Splits the first-layer weight along its 544 input rows into the three
    concatenated blocks (192/192/160), zero-pads the final (64, 2) weight to a
    (64, OUT_PAD) slab, and optionally casts everything to `dtype`
    (e.g. jnp.bfloat16) for half the weight/activation HBM traffic.
    """
    (w1, b1), (w2, b2), (w3, b3), w4 = params
    w1a = w1[:D_ASV, :]
    w1b = w1[D_ASV:2 * D_ASV, :]
    w1c = w1[2 * D_ASV:, :]
    w4p = jnp.pad(w4, ((0, 0), (0, OUT_PAD - w4.shape[1])))
    prep = (w1a, w1b, w1c, b1, w2, b2, w3, b3, w4p)
    return tuple(p.astype(dtype) for p in prep)


def baseline2_forward(embd_asv_enr, embd_asv_tst, embd_cm_tst, prepared,
                      tile_b=DEFAULT_TILE_B, vmem_limit_bytes=None):
    w1a, w1b, w1c, b1, w2, b2, w3, b3, w4p = prepared
    cdt = w1a.dtype  # compute/storage dtype chosen at prepare time

    # squeeze the singleton dim-1 (matches torch.squeeze(..., 1)).
    # .astype is a no-op when the inputs already match the prepared dtype.
    x1 = jnp.squeeze(embd_asv_enr, axis=1).astype(cdt)   # (B, 192)
    x2 = jnp.squeeze(embd_asv_tst, axis=1).astype(cdt)   # (B, 192)
    x3 = jnp.squeeze(embd_cm_tst, axis=1).astype(cdt)    # (B, 160)
    B = x1.shape[0]

    # Batch tile: multiple of ALIGN sublanes; ragged last tile handled by
    # Pallas masking (grid = cdiv), so no jnp.pad of the activations.
    tb = min(int(tile_b), _round_up(B, ALIGN))
    if B <= tb and B >= 2 * ALIGN:
        # Give v7x's second TensorCore something to do at small/medium batch.
        tb = _round_up(pl.cdiv(B, 2), ALIGN)
    grid = (pl.cdiv(B, tb),)

    def batch_map(i):
        return (i, 0)

    def const_map(i):
        return (0, 0)

    in_specs = [
        pl.BlockSpec((tb, D_ASV), batch_map),           # x1
        pl.BlockSpec((tb, D_ASV), batch_map),           # x2
        pl.BlockSpec((tb, D_CM), batch_map),            # x3
        pl.BlockSpec(w1a.shape, const_map),             # w1a (resident)
        pl.BlockSpec(w1b.shape, const_map),             # w1b
        pl.BlockSpec(w1c.shape, const_map),             # w1c
        pl.BlockSpec(b1.shape, const_map),              # b1
        pl.BlockSpec(w2.shape, const_map),              # w2
        pl.BlockSpec(b2.shape, const_map),              # b2
        pl.BlockSpec(w3.shape, const_map),              # w3
        pl.BlockSpec(b3.shape, const_map),              # b3
        pl.BlockSpec(w4p.shape, const_map),             # w4 (lane-padded)
    ]
    out_specs = pl.BlockSpec((tb, OUT_PAD), batch_map)

    cp_kwargs = dict(dimension_semantics=("parallel",))
    if vmem_limit_bytes is not None:
        cp_kwargs["vmem_limit_bytes"] = int(vmem_limit_bytes)

    out_padded = pl.pallas_call(
        baseline2_kernel,
        out_shape=jax.ShapeDtypeStruct((B, OUT_PAD), jnp.float32),
        grid=grid,
        in_specs=in_specs,
        out_specs=out_specs,
        compiler_params=pltpu.CompilerParams(**cp_kwargs),
    )(x1, x2, x3, w1a, w1b, w1c, b1, w2, b2, w3, b3, w4p)

    # Strip the small lane padding on the output.
    return out_padded[:, :OUT_DIM]


def init_params(key):
    """Deterministic synthetic parameters with PyTorch-Linear-like scaling."""
    keys = jax.random.split(key, 8)
    dims = [IN_DIM] + list(NUM_NODES)
    params = []
    for i in range(3):
        fan_in, fan_out = dims[i], dims[i + 1]
        bound = 1.0 / (fan_in ** 0.5)
        w = jax.random.uniform(keys[2 * i], (fan_in, fan_out), jnp.float32,
                               -bound, bound)
        b = jax.random.uniform(keys[2 * i + 1], (1, fan_out), jnp.float32,
                               -bound, bound)
        params.append((w, b))
    bound = 1.0 / (NUM_NODES[-1] ** 0.5)
    w4 = jax.random.uniform(keys[6], (NUM_NODES[-1], OUT_DIM), jnp.float32,
                            -bound, bound)
    params.append(w4)
    return params


def reference_forward(embd_asv_enr, embd_asv_tst, embd_cm_tst, params):
    """Pure-JAX f32 reference for correctness checking."""
    x = jnp.concatenate([jnp.squeeze(embd_asv_enr, 1).astype(jnp.float32),
                         jnp.squeeze(embd_asv_tst, 1).astype(jnp.float32),
                         jnp.squeeze(embd_cm_tst, 1).astype(jnp.float32)],
                        axis=1)
    (w1, b1), (w2, b2), (w3, b3), w4 = params
    h = _leaky_relu(x @ w1 + b1)
    h = _leaky_relu(h @ w2 + b2)
    h = _leaky_relu(h @ w3 + b3)
    return h @ w4


def _check(B, key, params, prepared, in_dtype, atol, rtol):
    k_a, k_b, k_c = jax.random.split(key, 3)
    embd_asv_enr = jax.random.normal(k_a, (B, 1, D_ASV), jnp.float32).astype(in_dtype)
    embd_asv_tst = jax.random.normal(k_b, (B, 1, D_ASV), jnp.float32).astype(in_dtype)
    embd_cm_tst = jax.random.normal(k_c, (B, 1, D_CM), jnp.float32).astype(in_dtype)

    fwd = jax.jit(functools.partial(baseline2_forward, prepared=prepared))
    out = jax.block_until_ready(fwd(embd_asv_enr, embd_asv_tst, embd_cm_tst))

    ref = reference_forward(embd_asv_enr, embd_asv_tst, embd_cm_tst, params)
    assert out.shape == (B, OUT_DIM), out.shape
    assert jnp.allclose(out, ref, atol=atol, rtol=rtol), (out, ref)


if __name__ == "__main__":
    key = jax.random.PRNGKey(0)
    k_p, k_small, k_big, k_bf16 = jax.random.split(key, 4)
    params = init_params(k_p)

    # --- f32 path (tight tolerance; split-K only reorders the f32 reduction).
    prepared_f32 = prepare_params(params, jnp.float32)
    # Small shape consistent with the module (B=2, single ragged grid tile).
    _check(2, k_small, params, prepared_f32, jnp.float32, atol=1e-4, rtol=1e-4)
    # Modest batch exercising multiple grid tiles + a ragged last tile.
    _check(300, k_big, params, prepared_f32, jnp.float32, atol=1e-4, rtol=1e-4)

    # --- optional bf16 storage path (halves HBM reads; looser tolerance).
    prepared_bf16 = prepare_params(params, jnp.bfloat16)
    _check(300, k_bf16, params, prepared_bf16, jnp.bfloat16, atol=5e-2, rtol=5e-2)

    # TODO(synk): calc_loss (weighted CrossEntropyLoss) is training-only and not
    # part of forward(); it is intentionally not implemented as a kernel.
    print("KERNEL_OK")
</pallas_src>

<mosaic_0001>
module attributes {stable_mosaic.version = 11 : i64} {
  func.func @baseline2_kernel(%arg0: i32, %arg1: memref<16x192xf32, #tpu.memory_space<vmem>>, %arg2: memref<16x192xf32, #tpu.memory_space<vmem>>, %arg3: memref<16x160xf32, #tpu.memory_space<vmem>>, %arg4: memref<192x256xf32, #tpu.memory_space<vmem>>, %arg5: memref<192x256xf32, #tpu.memory_space<vmem>>, %arg6: memref<160x256xf32, #tpu.memory_space<vmem>>, %arg7: memref<1x256xf32, #tpu.memory_space<vmem>>, %arg8: memref<256x128xf32, #tpu.memory_space<vmem>>, %arg9: memref<1x128xf32, #tpu.memory_space<vmem>>, %arg10: memref<128x64xf32, #tpu.memory_space<vmem>>, %arg11: memref<1x64xf32, #tpu.memory_space<vmem>>, %arg12: memref<64x8xf32, #tpu.memory_space<vmem>>, %arg13: memref<16x8xf32, #tpu.memory_space<vmem>>) attributes {dimension_semantics = [#tpu.dimension_semantics<parallel>], iteration_bounds = array<i64: 1>, scalar_prefetch = 0 : i64, scratch_operands = 0 : i64, tpu.core_type = #tpu.core_type<tc>, window_params = [{transform_indices = @transform_0, window_bounds = array<i64: 16, 192>}, {transform_indices = @transform_1, window_bounds = array<i64: 16, 192>}, {transform_indices = @transform_2, window_bounds = array<i64: 16, 160>}, {pipeline_mode = #tpu.pipeline_mode<synchronous>, transform_indices = @transform_3, window_bounds = array<i64: 192, 256>}, {pipeline_mode = #tpu.pipeline_mode<synchronous>, transform_indices = @transform_4, window_bounds = array<i64: 192, 256>}, {pipeline_mode = #tpu.pipeline_mode<synchronous>, transform_indices = @transform_5, window_bounds = array<i64: 160, 256>}, {pipeline_mode = #tpu.pipeline_mode<synchronous>, transform_indices = @transform_6, window_bounds = array<i64: 1, 256>}, {pipeline_mode = #tpu.pipeline_mode<synchronous>, transform_indices = @transform_7, window_bounds = array<i64: 256, 128>}, {pipeline_mode = #tpu.pipeline_mode<synchronous>, transform_indices = @transform_8, window_bounds = array<i64: 1, 128>}, {pipeline_mode = #tpu.pipeline_mode<synchronous>, transform_indices = @transform_9, window_bounds = array<i64: 128, 64>}, {pipeline_mode = #tpu.pipeline_mode<synchronous>, transform_indices = @transform_10, window_bounds = array<i64: 1, 64>}, {pipeline_mode = #tpu.pipeline_mode<synchronous>, transform_indices = @transform_11, window_bounds = array<i64: 64, 8>}, {transform_indices = @transform_12, window_bounds = array<i64: 16, 8>}]} {
    %c0 = arith.constant 0 : index
    %c0_0 = arith.constant 0 : index
    %0 = vector.load %arg1[%c0, %c0_0] : memref<16x192xf32, #tpu.memory_space<vmem>>, vector<16x192xf32>
    %c0_1 = arith.constant 0 : index
    %c0_2 = arith.constant 0 : index
    %1 = vector.load %arg4[%c0_1, %c0_2] : memref<192x256xf32, #tpu.memory_space<vmem>>, vector<192x256xf32>
    %cst = arith.constant dense<0.000000e+00> : vector<16x256xf32>
    %2 = tpu.matmul %0, %1, %cst {dimension_numbers = #tpu.dot_dimension_numbers<[1], [0], [0], [1], [0, 0, 1, 1], [], []>} : vector<16x192xf32>, vector<192x256xf32>, vector<16x256xf32> -> vector<16x256xf32>
    %c0_3 = arith.constant 0 : index
    %c0_4 = arith.constant 0 : index
    %3 = vector.load %arg2[%c0_3, %c0_4] : memref<16x192xf32, #tpu.memory_space<vmem>>, vector<16x192xf32>
    %c0_5 = arith.constant 0 : index
    %c0_6 = arith.constant 0 : index
    %4 = vector.load %arg5[%c0_5, %c0_6] : memref<192x256xf32, #tpu.memory_space<vmem>>, vector<192x256xf32>
    %cst_7 = arith.constant dense<0.000000e+00> : vector<16x256xf32>
    %5 = tpu.matmul %3, %4, %cst_7 {dimension_numbers = #tpu.dot_dimension_numbers<[1], [0], [0], [1], [0, 0, 1, 1], [], []>} : vector<16x192xf32>, vector<192x256xf32>, vector<16x256xf32> -> vector<16x256xf32>
    %6 = arith.addf %2, %5 : vector<16x256xf32>
    %c0_8 = arith.constant 0 : index
    %c0_9 = arith.constant 0 : index
    %7 = vector.load %arg3[%c0_8, %c0_9] : memref<16x160xf32, #tpu.memory_space<vmem>>, vector<16x160xf32>
    %c0_10 = arith.constant 0 : index
    %c0_11 = arith.constant 0 : index
    %8 = vector.load %arg6[%c0_10, %c0_11] : memref<160x256xf32, #tpu.memory_space<vmem>>, vector<160x256xf32>
    %cst_12 = arith.constant dense<0.000000e+00> : vector<16x256xf32>
    %9 = tpu.matmul %7, %8, %cst_12 {dimension_numbers = #tpu.dot_dimension_numbers<[1], [0], [0], [1], [0, 0, 1, 1], [], []>} : vector<16x160xf32>, vector<160x256xf32>, vector<16x256xf32> -> vector<16x256xf32>
    %10 = arith.addf %6, %9 : vector<16x256xf32>
    %c0_13 = arith.constant 0 : index
    %c0_14 = arith.constant 0 : index
    %11 = vector.load %arg7[%c0_13, %c0_14] : memref<1x256xf32, #tpu.memory_space<vmem>>, vector<1x256xf32>
    %12 = vector.broadcast %11 : vector<1x256xf32> to vector<16x256xf32>
    %13 = arith.addf %10, %12 : vector<16x256xf32>
    %cst_15 = arith.constant 0.000000e+00 : f32
    %14 = vector.broadcast %cst_15 : f32 to vector<16x256xf32>
    %15 = arith.cmpf ogt, %13, %14 : vector<16x256xf32>
    %cst_16 = arith.constant 3.000000e-01 : f32
    %16 = vector.broadcast %cst_16 : f32 to vector<16x256xf32>
    %17 = arith.mulf %16, %13 : vector<16x256xf32>
    %18 = arith.select %15, %13, %17 : vector<16x256xi1>, vector<16x256xf32>
    %c0_17 = arith.constant 0 : index
    %c0_18 = arith.constant 0 : index
    %19 = vector.load %arg8[%c0_17, %c0_18] : memref<256x128xf32, #tpu.memory_space<vmem>>, vector<256x128xf32>
    %cst_19 = arith.constant dense<0.000000e+00> : vector<16x128xf32>
    %20 = tpu.matmul %18, %19, %cst_19 {dimension_numbers = #tpu.dot_dimension_numbers<[1], [0], [0], [1], [0, 0, 1, 1], [], []>} : vector<16x256xf32>, vector<256x128xf32>, vector<16x128xf32> -> vector<16x128xf32>
    %c0_20 = arith.constant 0 : index
    %c0_21 = arith.constant 0 : index
    %21 = vector.load %arg9[%c0_20, %c0_21] : memref<1x128xf32, #tpu.memory_space<vmem>>, vector<1x128xf32>
    %22 = vector.broadcast %21 : vector<1x128xf32> to vector<16x128xf32>
    %23 = arith.addf %20, %22 : vector<16x128xf32>
    %cst_22 = arith.constant 0.000000e+00 : f32
    %24 = vector.broadcast %cst_22 : f32 to vector<16x128xf32>
    %25 = arith.cmpf ogt, %23, %24 : vector<16x128xf32>
    %cst_23 = arith.constant 3.000000e-01 : f32
    %26 = vector.broadcast %cst_23 : f32 to vector<16x128xf32>
    %27 = arith.mulf %26, %23 : vector<16x128xf32>
    %28 = arith.select %25, %23, %27 : vector<16x128xi1>, vector<16x128xf32>
    %c0_24 = arith.constant 0 : index
    %c0_25 = arith.constant 0 : index
    %29 = vector.load %arg10[%c0_24, %c0_25] : memref<128x64xf32, #tpu.memory_space<vmem>>, vector<128x64xf32>
    %cst_26 = arith.constant dense<0.000000e+00> : vector<16x64xf32>
    %30 = tpu.matmul %28, %29, %cst_26 {dimension_numbers = #tpu.dot_dimension_numbers<[1], [0], [0], [1], [0, 0, 1, 1], [], []>} : vector<16x128xf32>, vector<128x64xf32>, vector<16x64xf32> -> vector<16x64xf32>
    %c0_27 = arith.constant 0 : index
    %c0_28 = arith.constant 0 : index
    %31 = vector.load %arg11[%c0_27, %c0_28] : memref<1x64xf32, #tpu.memory_space<vmem>>, vector<1x64xf32>
    %32 = vector.broadcast %31 : vector<1x64xf32> to vector<16x64xf32>
    %33 = arith.addf %30, %32 : vector<16x64xf32>
    %cst_29 = arith.constant 0.000000e+00 : f32
    %34 = vector.broadcast %cst_29 : f32 to vector<16x64xf32>
    %35 = arith.cmpf ogt, %33, %34 : vector<16x64xf32>
    %cst_30 = arith.constant 3.000000e-01 : f32
    %36 = vector.broadcast %cst_30 : f32 to vector<16x64xf32>
    %37 = arith.mulf %36, %33 : vector<16x64xf32>
    %38 = arith.select %35, %33, %37 : vector<16x64xi1>, vector<16x64xf32>
    %c0_31 = arith.constant 0 : index
    %c0_32 = arith.constant 0 : index
    %39 = vector.load %arg12[%c0_31, %c0_32] : memref<64x8xf32, #tpu.memory_space<vmem>>, vector<64x8xf32>
    %cst_33 = arith.constant dense<0.000000e+00> : vector<16x8xf32>
    %40 = tpu.matmul %38, %39, %cst_33 {dimension_numbers = #tpu.dot_dimension_numbers<[1], [0], [0], [1], [0, 0, 1, 1], [], []>} : vector<16x64xf32>, vector<64x8xf32>, vector<16x8xf32> -> vector<16x8xf32>
    %c0_34 = arith.constant 0 : index
    %c0_35 = arith.constant 0 : index
    %41 = vector.load %arg13[%c0_34, %c0_35] : memref<16x8xf32, #tpu.memory_space<vmem>>, vector<16x8xf32>
    tpu.vector_store %arg13[%c0_34, %c0_35], %40 {strides = array<i32>} : memref<16x8xf32, #tpu.memory_space<vmem>>, vector<16x8xf32>,
    return
  }
  func.func @transform_0(%arg0: i32) -> (i32, i32) {
    %c0_i32 = arith.constant 0 : i32
    %c0_i32_0 = arith.constant 0 : i32
    return %arg0, %c0_i32 : i32, i32
  }
  func.func @transform_1(%arg0: i32) -> (i32, i32) {
    %c0_i32 = arith.constant 0 : i32
    %c0_i32_0 = arith.constant 0 : i32
    return %arg0, %c0_i32 : i32, i32
  }
  func.func @transform_2(%arg0: i32) -> (i32, i32) {
    %c0_i32 = arith.constant 0 : i32
    %c0_i32_0 = arith.constant 0 : i32
    return %arg0, %c0_i32 : i32, i32
  }
  func.func @transform_3(%arg0: i32) -> (i32, i32) {
    %c0_i32 = arith.constant 0 : i32
    %c0_i32_0 = arith.constant 0 : i32
    %c0_i32_1 = arith.constant 0 : i32
    return %c0_i32, %c0_i32_0 : i32, i32
  }
  func.func @transform_4(%arg0: i32) -> (i32, i32) {
    %c0_i32 = arith.constant 0 : i32
    %c0_i32_0 = arith.constant 0 : i32
    %c0_i32_1 = arith.constant 0 : i32
    return %c0_i32, %c0_i32_0 : i32, i32
  }
  func.func @transform_5(%arg0: i32) -> (i32, i32) {
    %c0_i32 = arith.constant 0 : i32
    %c0_i32_0 = arith.constant 0 : i32
    %c0_i32_1 = arith.constant 0 : i32
    return %c0_i32, %c0_i32_0 : i32, i32
  }
  func.func @transform_6(%arg0: i32) -> (i32, i32) {
    %c0_i32 = arith.constant 0 : i32
    %c0_i32_0 = arith.constant 0 : i32
    %c0_i32_1 = arith.constant 0 : i32
    return %c0_i32, %c0_i32_0 : i32, i32
  }
  func.func @transform_7(%arg0: i32) -> (i32, i32) {
    %c0_i32 = arith.constant 0 : i32
    %c0_i32_0 = arith.constant 0 : i32
    %c0_i32_1 = arith.constant 0 : i32
    return %c0_i32, %c0_i32_0 : i32, i32
  }
  func.func @transform_8(%arg0: i32) -> (i32, i32) {
    %c0_i32 = arith.constant 0 : i32
    %c0_i32_0 = arith.constant 0 : i32
    %c0_i32_1 = arith.constant 0 : i32
    return %c0_i32, %c0_i32_0 : i32, i32
  }
  func.func @transform_9(%arg0: i32) -> (i32, i32) {
    %c0_i32 = arith.constant 0 : i32
    %c0_i32_0 = arith.constant 0 : i32
    %c0_i32_1 = arith.constant 0 : i32
    return %c0_i32, %c0_i32_0 : i32, i32
  }
  func.func @transform_10(%arg0: i32) -> (i32, i32) {
    %c0_i32 = arith.constant 0 : i32
    %c0_i32_0 = arith.constant 0 : i32
    %c0_i32_1 = arith.constant 0 : i32
    return %c0_i32, %c0_i32_0 : i32, i32
  }
  func.func @transform_11(%arg0: i32) -> (i32, i32) {
    %c0_i32 = arith.constant 0 : i32
    %c0_i32_0 = arith.constant 0 : i32
    %c0_i32_1 = arith.constant 0 : i32
    return %c0_i32, %c0_i32_0 : i32, i32
  }
  func.func @transform_12(%arg0: i32) -> (i32, i32) {
    %c0_i32 = arith.constant 0 : i32
    %c0_i32_0 = arith.constant 0 : i32
    return %arg0, %c0_i32 : i32, i32
  }
}

</mosaic_0001>

<llo_original>
// kernel: baseline2_forward.1
$region0: #{baseline2_forward.1}
  #allocation0 [shape = 'u32[]', space=smem, size = 0x4, offset = 0x4, fixed_abs, tag = 'smem constant byte address 0x4 - core index']
  #allocation1 [shape = 'u32[144,128]{1,0:T(1,128)}', space=vmem, size = 0x12000, scoped, tag = 'internal scratch']
  %s0 = inlined_call_operand.vmem [shape: f32[2,192], index: 0, kind: input, shape index: {}]
  %s1 = inlined_call_operand.vmem [shape: f32[2,192], index: 1, kind: input, shape index: {}]
  %s2 = inlined_call_operand.vmem [shape: f32[2,160], index: 2, kind: input, shape index: {}]
  %s3 = inlined_call_operand.hbm [shape: f32[192,256], index: 3, kind: input, shape index: {}]
  %s4 = inlined_call_operand.hbm [shape: f32[192,256], index: 4, kind: input, shape index: {}]
  %s5 = inlined_call_operand.hbm [shape: f32[160,256], index: 5, kind: input, shape index: {}]
  %s6 = inlined_call_operand.vmem [shape: f32[1,256], index: 6, kind: input, shape index: {}]
  %s7 = inlined_call_operand.hbm [shape: f32[256,128], index: 7, kind: input, shape index: {}]
  %s8 = inlined_call_operand.vmem [shape: f32[1,128], index: 8, kind: input, shape index: {}]
  %s9 = inlined_call_operand.hbm [shape: f32[128,64], index: 9, kind: input, shape index: {}]
  %s10 = inlined_call_operand.vmem [shape: f32[1,64], index: 10, kind: input, shape index: {}]
  %s11 = inlined_call_operand.vmem [shape: f32[64,8], index: 11, kind: input, shape index: {}]
  %s12 = inlined_call_operand.hbm [shape: f32[2,8], index: 12, kind: output, shape index: {}]
  %s13 = sld [smem:[#allocation0]]
  $region78: #{baseline2_forward.1} parent=0
    _
  %s15 = ssub.s32 1, %s13
  %s16 = scalar_select 0, %s15, %s13
  $region1: #{baseline2_forward.1} parent=0
    #allocation2 [shape = 'u8[196608]{0}', space=vmem, size = 0x30000, scoped, tag = 'input window, operand 3, single buffered']
    #allocation3 [shape = 's32[1]{0}', space=sflag, size = 0x4, scoped, tag = 'scoped memory for baseline2_forward.1']
    #allocation4 [shape = 's32[1]{0}', space=sflag, size = 0x4, scoped, tag = 'scoped memory for baseline2_forward.1']
    #allocation5 [shape = 'u8[196608]{0}', space=vmem, size = 0x30000, scoped, tag = 'input window, operand 4, single buffered']
    #allocation6 [shape = 's32[1]{0}', space=sflag, size = 0x4, scoped, tag = 'scoped memory for baseline2_forward.1']
    #allocation7 [shape = 'u8[163840]{0}', space=vmem, size = 0x28000, scoped, tag = 'input window, operand 5, single buffered']
    #allocation8 [shape = 'u8[131072]{0}', space=vmem, size = 0x20000, scoped, tag = 'input window, operand 7, single buffered']
    #allocation9 [shape = 's32[1]{0}', space=sflag, size = 0x4, scoped, tag = 'scoped memory for baseline2_forward.1']
    #allocation10 [shape = 'u8[65536]{0}', space=vmem, size = 0x10000, scoped, tag = 'input window, operand 9, single buffered']
    #allocation11 [shape = 'u8[8192]{0}', space=vmem, size = 0x2000, scoped, tag = 'output window, operand 0, single buffered']
    %17 = vsyncpa [#allocation3], 0
    %18 = vsyncpa [#allocation6], 0
    %19 = vsyncpa [#allocation9], 0
    %20 = vsyncpa [#allocation4], 0
    // Predicated region
    $region2: #{baseline2_forward.1} parent=1 // pred_check
      _
    $region3: #{baseline2_forward.1} parent=1 // pred_check_branch
      %22 = sbr.rel (0) target = $region5
    $region4: #{baseline2_forward.1} parent=1 // pred_region
      _
    $region5: #{baseline2_forward.1} parent=1 // pred_fallthru
      _
    // Predicated region
    $region6: #{baseline2_forward.1} parent=1 // pred_check
      _
    $region7: #{baseline2_forward.1} parent=1 // pred_check_branch
      %24 = sbr.rel (0) target = $region9
    $region8: #{baseline2_forward.1} parent=1 // pred_region
      _
    $region9: #{baseline2_forward.1} parent=1 // pred_fallthru
      _
    // Predicated region
    $region10: #{baseline2_forward.1} parent=1 // pred_check
      _
    $region11: #{baseline2_forward.1} parent=1 // pred_check_branch
      %26 = sbr.rel (0) target = $region13
    $region12: #{baseline2_forward.1} parent=1 // pred_region
      _
    $region13: #{baseline2_forward.1} parent=1 // pred_fallthru
      _
    // Predicated region
    $region14: #{baseline2_forward.1} parent=1 // pred_check
      _
    $region15: #{baseline2_forward.1} parent=1 // pred_check_branch
      %28 = sbr.rel (0) target = $region17
    $region16: #{baseline2_forward.1} parent=1 // pred_region
      %s30 = ssub.s32 6144, 6144
      %31 = vsyncadd [#allocation3], %s30
      %s32 = sshll.u32 [#allocation2], 4
      %s33 = int_to_ptr.vmem [resolvable:$true] %s32
      %38 = dma.hbm_to_vmem [thread:$0]  %s3, 6144, %s33, [#allocation3], 256, 256, 16
    $region17: #{baseline2_forward.1} parent=1 // pred_fallthru
      _
    // Predicated region
    $region18: #{baseline2_forward.1} parent=1 // pred_check
      _
    $region19: #{baseline2_forward.1} parent=1 // pred_check_branch
      %40 = sbr.rel (0) target = $region21
    $region20: #{baseline2_forward.1} parent=1 // pred_region
      %s42 = ssub.s32 6144, 6144
      %43 = vsyncadd [#allocation6], %s42
      %s44 = sshll.u32 [#allocation5], 4
      %s45 = int_to_ptr.vmem [resolvable:$true] %s44
      %50 = dma.hbm_to_vmem [thread:$0]  %s4, 6144, %s45, [#allocation6], 256, 256, 16
    $region21: #{baseline2_forward.1} parent=1 // pred_fallthru
      _
    // Predicated region
    $region22: #{baseline2_forward.1} parent=1 // pred_check
      _
    $region23: #{baseline2_forward.1} parent=1 // pred_check_branch
      %52 = sbr.rel (0) target = $region25
    $region24: #{baseline2_forward.1} parent=1 // pred_region
      %s54 = ssub.s32 5120, 5120
      %55 = vsyncadd [#allocation6], %s54
      %s56 = sshll.u32 [#allocation7], 4
      %s57 = int_to_ptr.vmem [resolvable:$true] %s56
      %62 = dma.hbm_to_vmem [thread:$0]  %s5, 5120, %s57, [#allocation6], 256, 256, 16
    $region25: #{baseline2_forward.1} parent=1 // pred_fallthru
      _
    // Predicated region
    $region26: #{baseline2_forward.1} parent=1 // pred_check
      _
    $region27: #{baseline2_forward.1} parent=1 // pred_check_branch
      %64 = sbr.rel (0) target = $region29
    $region28: #{baseline2_forward.1} parent=1 // pred_region
      _
    $region29: #{baseline2_forward.1} parent=1 // pred_fallthru
      _
    // Predicated region
    $region30: #{baseline2_forward.1} parent=1 // pred_check
      _
    $region31: #{baseline2_forward.1} parent=1 // pred_check_branch
      %66 = sbr.rel (0) target = $region33
    $region32: #{baseline2_forward.1} parent=1 // pred_region
      %s68 = ssub.s32 4096, 4096
      %69 = vsyncadd [#allocation9], %s68
      %s70 = sshll.u32 [#allocation8], 4
      %s71 = int_to_ptr.vmem [resolvable:$true] %s70
      %76 = dma.hbm_to_vmem [thread:$0]  %s7, 4096, %s71, [#allocation9], 128, 128, 8
    $region33: #{baseline2_forward.1} parent=1 // pred_fallthru
      _
    // Predicated region
    $region34: #{baseline2_forward.1} parent=1 // pred_check
      _
    $region35: #{baseline2_forward.1} parent=1 // pred_check_branch
      %78 = sbr.rel (0) target = $region37
    $region36: #{baseline2_forward.1} parent=1 // pred_region
      _
    $region37: #{baseline2_forward.1} parent=1 // pred_fallthru
      _
    // Predicated region
    $region38: #{baseline2_forward.1} parent=1 // pred_check
      _
    $region39: #{baseline2_forward.1} parent=1 // pred_check_branch
      %80 = sbr.rel (0) target = $region41
    $region40: #{baseline2_forward.1} parent=1 // pred_region
      %s82 = ssub.s32 2048, 2048
      %83 = vsyncadd [#allocation9], %s82
      %s84 = sshll.u32 [#allocation10], 4
      %s85 = int_to_ptr.vmem [resolvable:$true] %s84
      %90 = dma.hbm_to_vmem [thread:$0]  %s9, 2048, %s85, [#allocation9], 128, 128, 8
    $region41: #{baseline2_forward.1} parent=1 // pred_fallthru
      _
    // Predicated region
    $region42: #{baseline2_forward.1} parent=1 // pred_check
      _
    $region43: #{baseline2_forward.1} parent=1 // pred_check_branch
      %92 = sbr.rel (0) target = $region45
    $region44: #{baseline2_forward.1} parent=1 // pred_region
      _
    $region45: #{baseline2_forward.1} parent=1 // pred_fallthru
      _
    // Predicated region
    $region46: #{baseline2_forward.1} parent=1 // pred_check
      _
    $region47: #{baseline2_forward.1} parent=1 // pred_check_branch
      %94 = sbr.rel (0) target = $region49
    $region48: #{baseline2_forward.1} parent=1 // pred_region
      _
    $region49: #{baseline2_forward.1} parent=1 // pred_fallthru
      _
    // Predicated region
    $region50: #{baseline2_forward.1} parent=1 // pred_check
      _
    $region51: #{baseline2_forward.1} parent=1 // pred_check_branch
      %96 = sbr.rel (0) target = $region53
    $region52: #{baseline2_forward.1} parent=1 // pred_region
      %97 = dma.done [#allocation3], 6144
    $region53: #{baseline2_forward.1} parent=1 // pred_fallthru
      _
    // Predicated region
    $region54: #{baseline2_forward.1} parent=1 // pred_check
      _
    $region55: #{baseline2_forward.1} parent=1 // pred_check_branch
      %99 = sbr.rel (0) target = $region57
    $region56: #{baseline2_forward.1} parent=1 // pred_region
      %100 = dma.done [#allocation6], 6144
    $region57: #{baseline2_forward.1} parent=1 // pred_fallthru
      _
    // Predicated region
    $region58: #{baseline2_forward.1} parent=1 // pred_check
      _
    $region59: #{baseline2_forward.1} parent=1 // pred_check_branch
      %102 = sbr.rel (0) target = $region61
    $region60: #{baseline2_forward.1} parent=1 // pred_region
      %103 = dma.done [#allocation6], 5120
    $region61: #{baseline2_forward.1} parent=1 // pred_fallthru
      _
    // Predicated region
    $region62: #{baseline2_forward.1} parent=1 // pred_check
      _
    $region63: #{baseline2_forward.1} parent=1 // pred_check_branch
      %105 = sbr.rel (0) target = $region65
    $region64: #{baseline2_forward.1} parent=1 // pred_region
      %106 = dma.done [#allocation9], 4096
    $region65: #{baseline2_forward.1} parent=1 // pred_fallthru
      _
    // Predicated region
    $region66: #{baseline2_forward.1} parent=1 // pred_check
      _
    $region67: #{baseline2_forward.1} parent=1 // pred_check_branch
      %108 = sbr.rel (0) target = $region69
    $region68: #{baseline2_forward.1} parent=1 // pred_region
      %109 = dma.done [#allocation9], 2048
    $region69: #{baseline2_forward.1} parent=1 // pred_fallthru
      _
    %v110 = vld [vmem:[%s0] sm:$0xf]
    %v111 = vld [vmem:[%s0 + $0x4] sm:$0xf]
    %v112 = vld [vmem:[%s0 + $0x8] sm:$0xf]
    %v113 = vld [vmem:[%s0 + $0xc] sm:$0xf]
    %v114 = vld [vmem:[%s0 + $0x10] sm:$0xf]
    %v115 = vld [vmem:[%s0 + $0x14] sm:$0xf]
    %v116 = vld [vmem:[%s0 + $0x18] sm:$0xf]
    %v117 = vld [vmem:[%s0 + $0x1c] sm:$0xf]
    %v118 = vld [vmem:[#allocation2] sm:$0xff]
    %v119 = vld [vmem:[#allocation2 + $0x8] sm:$0xff]
    %v120 = vld [vmem:[#allocation2 + $0x10] sm:$0xff]
    %v121 = vld [vmem:[#allocation2 + $0x18] sm:$0xff]
    %v122 = vld [vmem:[#allocation2 + $0x20] sm:$0xff]
    %v123 = vld [vmem:[#allocation2 + $0x28] sm:$0xff]
    %v124 = vld [vmem:[#allocation2 + $0x30] sm:$0xff]
    %v125 = vld [vmem:[#allocation2 + $0x38] sm:$0xff]
    %v126 = vld [vmem:[#allocation2 + $0x40] sm:$0xff]
    %v127 = vld [vmem:[#allocation2 + $0x48] sm:$0xff]
    %v128 = vld [vmem:[#allocation2 + $0x50] sm:$0xff]
    %v129 = vld [vmem:[#allocation2 + $0x58] sm:$0xff]
    %v130 = vld [vmem:[#allocation2 + $0x60] sm:$0xff]
    %v131 = vld [vmem:[#allocation2 + $0x68] sm:$0xff]
    %v132 = vld [vmem:[#allocation2 + $0x70] sm:$0xff]
    %v133 = vld [vmem:[#allocation2 + $0x78] sm:$0xff]
    %v134 = vld [vmem:[#allocation2 + $0x80] sm:$0xff]
    %v135 = vld [vmem:[#allocation2 + $0x88] sm:$0xff]
    %v136 = vld [vmem:[#allocation2 + $0x90] sm:$0xff]
    %v137 = vld [vmem:[#allocation2 + $0x98] sm:$0xff]
    %v138 = vld [vmem:[#allocation2 + $0xa0] sm:$0xff]
    %v139 = vld [vmem:[#allocation2 + $0xa8] sm:$0xff]
    %v140 = vld [vmem:[#allocation2 + $0xb0] sm:$0xff]
    %v141 = vld [vmem:[#allocation2 + $0xb8] sm:$0xff]
    %v142 = vld [vmem:[#allocation2 + $0xc0] sm:$0xff]
    %v143 = vld [vmem:[#allocation2 + $0xc8] sm:$0xff]
    %v144 = vld [vmem:[#allocation2 + $0xd0] sm:$0xff]
    %v145 = vld [vmem:[#allocation2 + $0xd8] sm:$0xff]
    %v146 = vld [vmem:[#allocation2 + $0xe0] sm:$0xff]
    %v147 = vld [vmem:[#allocation2 + $0xe8] sm:$0xff]
    %v148 = vld [vmem:[#allocation2 + $0xf0] sm:$0xff]
    %v149 = vld [vmem:[#allocation2 + $0xf8] sm:$0xff]
    %v150 = vld [vmem:[#allocation2 + $0x100] sm:$0xff]
    %v151 = vld [vmem:[#allocation2 + $0x108] sm:$0xff]
    %v152 = vld [vmem:[#allocation2 + $0x110] sm:$0xff]
    %v153 = vld [vmem:[#allocation2 + $0x118] sm:$0xff]
    %v154 = vld [vmem:[#allocation2 + $0x120] sm:$0xff]
    %v155 = vld [vmem:[#allocation2 + $0x128] sm:$0xff]
    %v156 = vld [vmem:[#allocation2 + $0x130] sm:$0xff]
    %v157 = vld [vmem:[#allocation2 + $0x138] sm:$0xff]
    %v158 = vld [vmem:[#allocation2 + $0x140] sm:$0xff]
    %v159 = vld [vmem:[#allocation2 + $0x148] sm:$0xff]
    %v160 = vld [vmem:[#allocation2 + $0x150] sm:$0xff]
    %v161 = vld [vmem:[#allocation2 + $0x158] sm:$0xff]
    %v162 = vld [vmem:[#allocation2 + $0x160] sm:$0xff]
    %v163 = vld [vmem:[#allocation2 + $0x168] sm:$0xff]
    %v164 = vld [vmem:[#allocation2 + $0x170] sm:$0xff]
    %v165 = vld [vmem:[#allocation2 + $0x178] sm:$0xff]
    %v166 = vld [vmem:[%s1] sm:$0xf]
    %v167 = vld [vmem:[%s1 + $0x4] sm:$0xf]
    %v168 = vld [vmem:[%s1 + $0x8] sm:$0xf]
    %v169 = vld [vmem:[%s1 + $0xc] sm:$0xf]
    %v170 = vld [vmem:[%s1 + $0x10] sm:$0xf]
    %v171 = vld [vmem:[%s1 + $0x14] sm:$0xf]
    %v172 = vld [vmem:[%s1 + $0x18] sm:$0xf]
    %v173 = vld [vmem:[%s1 + $0x1c] sm:$0xf]
    %v174 = vld [vmem:[#allocation5] sm:$0xff]
    %v175 = vld [vmem:[#allocation5 + $0x8] sm:$0xff]
    %v176 = vld [vmem:[#allocation5 + $0x10] sm:$0xff]
    %v177 = vld [vmem:[#allocation5 + $0x18] sm:$0xff]
    %v178 = vld [vmem:[#allocation5 + $0x20] sm:$0xff]
    %v179 = vld [vmem:[#allocation5 + $0x28] sm:$0xff]
    %v180 = vld [vmem:[#allocation5 + $0x30] sm:$0xff]
    %v181 = vld [vmem:[#allocation5 + $0x38] sm:$0xff]
    %v182 = vld [vmem:[#allocation5 + $0x40] sm:$0xff]
    %v183 = vld [vmem:[#allocation5 + $0x48] sm:$0xff]
    %v184 = vld [vmem:[#allocation5 + $0x50] sm:$0xff]
    %v185 = vld [vmem:[#allocation5 + $0x58] sm:$0xff]
    %v186 = vld [vmem:[#allocation5 + $0x60] sm:$0xff]
    %v187 = vld [vmem:[#allocation5 + $0x68] sm:$0xff]
    %v188 = vld [vmem:[#allocation5 + $0x70] sm:$0xff]
    %v189 = vld [vmem:[#allocation5 + $0x78] sm:$0xff]
    %v190 = vld [vmem:[#allocation5 + $0x80] sm:$0xff]
    %v191 = vld [vmem:[#allocation5 + $0x88] sm:$0xff]
    %v192 = vld [vmem:[#allocation5 + $0x90] sm:$0xff]
    %v193 = vld [vmem:[#allocation5 + $0x98] sm:$0xff]
    %v194 = vld [vmem:[#allocation5 + $0xa0] sm:$0xff]
    %v195 = vld [vmem:[#allocation5 + $0xa8] sm:$0xff]
    %v196 = vld [vmem:[#allocation5 + $0xb0] sm:$0xff]
    %v197 = vld [vmem:[#allocation5 + $0xb8] sm:$0xff]
    %v198 = vld [vmem:[#allocation5 + $0xc0] sm:$0xff]
    %v199 = vld [vmem:[#allocation5 + $0xc8] sm:$0xff]
    %v200 = vld [vmem:[#allocation5 + $0xd0] sm:$0xff]
    %v201 = vld [vmem:[#allocation5 + $0xd8] sm:$0xff]
    %v202 = vld [vmem:[#allocation5 + $0xe0] sm:$0xff]
    %v203 = vld [vmem:[#allocation5 + $0xe8] sm:$0xff]
    %v204 = vld [vmem:[#allocation5 + $0xf0] sm:$0xff]
    %v205 = vld [vmem:[#allocation5 + $0xf8] sm:$0xff]
    %v206 = vld [vmem:[#allocation5 + $0x100] sm:$0xff]
    %v207 = vld [vmem:[#allocation5 + $0x108] sm:$0xff]
    %v208 = vld [vmem:[#allocation5 + $0x110] sm:$0xff]
    %v209 = vld [vmem:[#allocation5 + $0x118] sm:$0xff]
    %v210 = vld [vmem:[#allocation5 + $0x120] sm:$0xff]
    %v211 = vld [vmem:[#allocation5 + $0x128] sm:$0xff]
    %v212 = vld [vmem:[#allocation5 + $0x130] sm:$0xff]
    %v213 = vld [vmem:[#allocation5 + $0x138] sm:$0xff]
    %v214 = vld [vmem:[#allocation5 + $0x140] sm:$0xff]
    %v215 = vld [vmem:[#allocation5 + $0x148] sm:$0xff]
    %v216 = vld [vmem:[#allocation5 + $0x150] sm:$0xff]
    %v217 = vld [vmem:[#allocation5 + $0x158] sm:$0xff]
    %v218 = vld [vmem:[#allocation5 + $0x160] sm:$0xff]
    %v219 = vld [vmem:[#allocation5 + $0x168] sm:$0xff]
    %v220 = vld [vmem:[#allocation5 + $0x170] sm:$0xff]
    %v221 = vld [vmem:[#allocation5 + $0x178] sm:$0xff]
    %v230 = vcombine.low %v166, %v167
    %v231 = vcombine.low %v168, %v169
    %v233 = vunpack.c.l.s4 1983009808
    %v234 = vunpack.c.0.s8 %v233
    %v235 = vlaneseq
    %v236 = vshrl.u32 %v235, 7
    %v237 = vsub.s32 %v234, %v236
    %v238 = vrot.slane %v230, %v237
    %v240 = vunpack.c.l.s4 1983009808
    %v241 = vunpack.c.0.s8 %v240
    %v242 = vlaneseq
    %v243 = vshrl.u32 %v242, 7
    %v244 = vsub.s32 %v241, %v243
    %v245 = vrot.slane %v231, %v244
    %v246 = vcombine.low %v238, %v245
    %v247 = vcombine.high %v238, %v245
    %v248 = vcombine.low %v170, %v171
    %v249 = vcombine.low %v172, %v173
    %v251 = vunpack.c.l.s4 1983009808
    %v252 = vunpack.c.0.s8 %v251
    %v253 = vlaneseq
    %v254 = vshrl.u32 %v253, 7
    %v255 = vsub.s32 %v252, %v254
    %v256 = vrot.slane %v248, %v255
    %v258 = vunpack.c.l.s4 1983009808
    %v259 = vunpack.c.0.s8 %v258
    %v260 = vlaneseq
    %v261 = vshrl.u32 %v260, 7
    %v262 = vsub.s32 %v259, %v261
    %v263 = vrot.slane %v249, %v262
    %v264 = vcombine.low %v256, %v263
    %v265 = vcombine.high %v256, %v263
    %vm268 = vcmask 523264
    %v269 = vsel %vm268, %v247, 0
    %v271 = vsel %vm268, %v265, 0
    %273 = vmatprep.subr.mxu0 %v175
    %274 = vmatpush1.msra.mxu0 %v174
    %275 = vmatprep.subr.mxu0 %v177
    %276 = vmatpush1.msra.mxu0 %v176
    %277 = vmatprep.subr.mxu0 %v179
    %278 = vmatpush1.msra.mxu0 %v178
    %279 = vmatprep.subr.mxu0 %v181
    %280 = vmatpush1.msra.mxu0 %v180
    %281 = vmatprep.subr.mxu0 %v183
    %282 = vmatpush1.msra.mxu0 %v182
    %283 = vmatprep.subr.mxu0 %v185
    %284 = vmatpush1.msra.mxu0 %v184
    %285 = vmatprep.subr.mxu0 %v187
    %286 = vmatpush1.msra.mxu0 %v186
    %287 = vmatprep.subr.mxu0 %v189
    %288 = vmatpush1.msra.mxu0 %v188
    %289 = vmatprep.subr.mxu0 %v191
    %290 = vmatpush1.msra.mxu0 %v190
    %291 = vmatprep.subr.mxu0 %v193
    %292 = vmatpush1.msra.mxu0 %v192
    %293 = vmatprep.subr.mxu0 %v195
    %294 = vmatpush1.msra.mxu0 %v194
    %295 = vmatprep.subr.mxu0 %v197
    %296 = vmatpush1.msra.mxu0 %v196
    %297 = vmatprep.subr.mxu0 %v199
    %298 = vmatpush1.msra.mxu0 %v198
    %299 = vmatprep.subr.mxu0 %v201
    %300 = vmatpush1.msra.mxu0 %v200
    %301 = vmatprep.subr.mxu0 %v203
    %302 = vmatpush1.msra.mxu0 %v202
    %303 = vmatprep.subr.mxu0 %v205
    %304 = vmatpush1.msra.mxu0 %v204
    %305 = vmatprep.subr.mxu0 %v207
    %306 = vmatpush1.msra.mxu0 %v206
    %307 = vmatprep.subr.mxu0 %v209
    %308 = vmatpush1.msra.mxu0 %v208
    %309 = vmatprep.subr.mxu0 %v211
    %310 = vmatpush1.msra.mxu0 %v210
    %311 = vmatprep.subr.mxu0 %v213
    %312 = vmatpush1.msra.mxu0 %v212
    %313 = vmatprep.subr.mxu0 %v215
    %314 = vmatpush1.msra.mxu0 %v214
    %315 = vmatprep.subr.mxu0 %v217
    %316 = vmatpush1.msra.mxu0 %v216
    %317 = vmatprep.subr.mxu0 %v219
    %318 = vmatpush1.msra.mxu0 %v218
    %319 = vmatprep.subr.mxu0 %v221
    %320 = vmatpush1.msra.mxu0 %v220
    %321 = vmatprep.subr.mxu0 0.0
    %322 = vmatpush1.msra.mxu0 0.0
    %323 = vmatprep.subr.mxu0 0.0
    %324 = vmatpush1.msra.mxu0 0.0
    %325 = vmatprep.subr.mxu0 0.0
    %326 = vmatpush1.msra.mxu0 0.0
    %327 = vmatprep.subr.mxu0 0.0
    %328 = vmatpush1.msra.mxu0 0.0
    %329 = vmatprep.subr.mxu0 0.0
    %330 = vmatpush1.msra.mxu0 0.0
    %331 = vmatprep.subr.mxu0 0.0
    %332 = vmatpush1.msra.mxu0 0.0
    %333 = vmatprep.subr.mxu0 0.0
    %334 = vmatpush1.msra.mxu0 0.0
    %335 = vmatprep.subr.mxu0 0.0
    %336 = vmatpush1.msra.mxu0 0.0
    %337 = vmatprep.mubr.f32.mxu0 %v269
    %338 = vmatmul.mubr.f32.gmra.mrb[0].mxu0 %v246
    %v339 = vpop.f32.mrb[0].mxu0
    %v340 = vadd.f32 0.0, %v339
    %v341 = vpop.f32.mrb[0].mxu0
    %v342 = vadd.f32 0.0, %v341
    %343 = vmatprep.mubr.f32.mxu0 %v271
    %344 = vmatmul.mubr.f32.gmra.mrb[0].mxu0 %v264
    %v345 = vpop.f32.mrb[0].mxu0
    %v346 = vadd.f32 0.0, %v345
    %v347 = vpop.f32.mrb[0].mxu0
    %v348 = vadd.f32 0.0, %v347
    %349 = vdwg.mxu0
    %v358 = vcombine.low %v110, %v111
    %v359 = vcombine.low %v112, %v113
    %v361 = vunpack.c.l.s4 1983009808
    %v362 = vunpack.c.0.s8 %v361
    %v363 = vlaneseq
    %v364 = vshrl.u32 %v363, 7
    %v365 = vsub.s32 %v362, %v364
    %v366 = vrot.slane %v358, %v365
    %v368 = vunpack.c.l.s4 1983009808
    %v369 = vunpack.c.0.s8 %v368
    %v370 = vlaneseq
    %v371 = vshrl.u32 %v370, 7
    %v372 = vsub.s32 %v369, %v371
    %v373 = vrot.slane %v359, %v372
    %v374 = vcombine.low %v366, %v373
    %v375 = vcombine.high %v366, %v373
    %v376 = vcombine.low %v114, %v115
    %v377 = vcombine.low %v116, %v117
    %v379 = vunpack.c.l.s4 1983009808
    %v380 = vunpack.c.0.s8 %v379
    %v381 = vlaneseq
    %v382 = vshrl.u32 %v381, 7
    %v383 = vsub.s32 %v380, %v382
    %v384 = vrot.slane %v376, %v383
    %v386 = vunpack.c.l.s4 1983009808
    %v387 = vunpack.c.0.s8 %v386
    %v388 = vlaneseq
    %v389 = vshrl.u32 %v388, 7
    %v390 = vsub.s32 %v387, %v389
    %v391 = vrot.slane %v377, %v390
    %v392 = vcombine.low %v384, %v391
    %v393 = vcombine.high %v384, %v391
    %v396 = vsel %vm268, %v375, 0
    %v398 = vsel %vm268, %v393, 0
    %400 = vmatprep.subr.mxu0 %v119
    %401 = vmatpush1.msra.mxu0 %v118
    %402 = vmatprep.subr.mxu0 %v121
    %403 = vmatpush1.msra.mxu0 %v120
    %404 = vmatprep.subr.mxu0 %v123
    %405 = vmatpush1.msra.mxu0 %v122
    %406 = vmatprep.subr.mxu0 %v125
    %407 = vmatpush1.msra.mxu0 %v124
    %408 = vmatprep.subr.mxu0 %v127
    %409 = vmatpush1.msra.mxu0 %v126
    %410 = vmatprep.subr.mxu0 %v129
    %411 = vmatpush1.msra.mxu0 %v128
    %412 = vmatprep.subr.mxu0 %v131
    %413 = vmatpush1.msra.mxu0 %v130
    %414 = vmatprep.subr.mxu0 %v133
    %415 = vmatpush1.msra.mxu0 %v132
    %416 = vmatprep.subr.mxu0 %v135
    %417 = vmatpush1.msra.mxu0 %v134
    %418 = vmatprep.subr.mxu0 %v137
    %419 = vmatpush1.msra.mxu0 %v136
    %420 = vmatprep.subr.mxu0 %v139
    %421 = vmatpush1.msra.mxu0 %v138
    %422 = vmatprep.subr.mxu0 %v141
    %423 = vmatpush1.msra.mxu0 %v140
    %424 = vmatprep.subr.mxu0 %v143
    %425 = vmatpush1.msra.mxu0 %v142
    %426 = vmatprep.subr.mxu0 %v145
    %427 = vmatpush1.msra.mxu0 %v144
    %428 = vmatprep.subr.mxu0 %v147
    %429 = vmatpush1.msra.mxu0 %v146
    %430 = vmatprep.subr.mxu0 %v149
    %431 = vmatpush1.msra.mxu0 %v148
    %432 = vmatprep.subr.mxu0 %v151
    %433 = vmatpush1.msra.mxu0 %v150
    %434 = vmatprep.subr.mxu0 %v153
    %435 = vmatpush1.msra.mxu0 %v152
    %436 = vmatprep.subr.mxu0 %v155
    %437 = vmatpush1.msra.mxu0 %v154
    %438 = vmatprep.subr.mxu0 %v157
    %439 = vmatpush1.msra.mxu0 %v156
    %440 = vmatprep.subr.mxu0 %v159
    %441 = vmatpush1.msra.mxu0 %v158
    %442 = vmatprep.subr.mxu0 %v161
    %443 = vmatpush1.msra.mxu0 %v160
    %444 = vmatprep.subr.mxu0 %v163
    %445 = vmatpush1.msra.mxu0 %v162
    %446 = vmatprep.subr.mxu0 %v165
    %447 = vmatpush1.msra.mxu0 %v164
    %448 = vmatprep.subr.mxu0 0.0
    %449 = vmatpush1.msra.mxu0 0.0
    %450 = vmatprep.subr.mxu0 0.0
    %451 = vmatpush1.msra.mxu0 0.0
    %452 = vmatprep.subr.mxu0 0.0
    %453 = vmatpush1.msra.mxu0 0.0
    %454 = vmatprep.subr.mxu0 0.0
    %455 = vmatpush1.msra.mxu0 0.0
    %456 = vmatprep.subr.mxu0 0.0
    %457 = vmatpush1.msra.mxu0 0.0
    %458 = vmatprep.subr.mxu0 0.0
    %459 = vmatpush1.msra.mxu0 0.0
    %460 = vmatprep.subr.mxu0 0.0
    %461 = vmatpush1.msra.mxu0 0.0
    %462 = vmatprep.subr.mxu0 0.0
    %463 = vmatpush1.msra.mxu0 0.0
    %464 = vmatprep.mubr.f32.mxu0 %v396
    %465 = vmatmul.mubr.f32.gmra.mrb[0].mxu0 %v374
    %v466 = vpop.f32.mrb[0].mxu0
    %v467 = vadd.f32 %v340, %v466
    %v468 = vpop.f32.mrb[0].mxu0
    %v469 = vadd.f32 %v342, %v468
    %470 = vmatprep.mubr.f32.mxu0 %v398
    %471 = vmatmul.mubr.f32.gmra.mrb[0].mxu0 %v392
    %v472 = vpop.f32.mrb[0].mxu0
    %v473 = vadd.f32 %v346, %v472
    %v474 = vpop.f32.mrb[0].mxu0
    %v475 = vadd.f32 %v348, %v474
    %476 = vdwg.mxu0
    %v477 = vld [vmem:[%s2] sm:$0xf]
    %v478 = vld [vmem:[%s2 + $0x4] sm:$0xf]
    %v479 = vld [vmem:[%s2 + $0x8] sm:$0xf]
    %v480 = vld [vmem:[%s2 + $0xc] sm:$0xf]
    %v481 = vld [vmem:[%s2 + $0x10] sm:$0xf]
    %v482 = vld [vmem:[%s2 + $0x14] sm:$0xf]
    %v483 = vld [vmem:[%s2 + $0x18] sm:$0xf]
    %v484 = vld [vmem:[%s2 + $0x1c] sm:$0xf]
    %v485 = vld [vmem:[#allocation7] sm:$0xff]
    %v486 = vld [vmem:[#allocation7 + $0x8] sm:$0xff]
    %v487 = vld [vmem:[#allocation7 + $0x10] sm:$0xff]
    %v488 = vld [vmem:[#allocation7 + $0x18] sm:$0xff]
    %v489 = vld [vmem:[#allocation7 + $0x20] sm:$0xff]
    %v490 = vld [vmem:[#allocation7 + $0x28] sm:$0xff]
    %v491 = vld [vmem:[#allocation7 + $0x30] sm:$0xff]
    %v492 = vld [vmem:[#allocation7 + $0x38] sm:$0xff]
    %v493 = vld [vmem:[#allocation7 + $0x40] sm:$0xff]
    %v494 = vld [vmem:[#allocation7 + $0x48] sm:$0xff]
    %v495 = vld [vmem:[#allocation7 + $0x50] sm:$0xff]
    %v496 = vld [vmem:[#allocation7 + $0x58] sm:$0xff]
    %v497 = vld [vmem:[#allocation7 + $0x60] sm:$0xff]
    %v498 = vld [vmem:[#allocation7 + $0x68] sm:$0xff]
    %v499 = vld [vmem:[#allocation7 + $0x70] sm:$0xff]
    %v500 = vld [vmem:[#allocation7 + $0x78] sm:$0xff]
    %v501 = vld [vmem:[#allocation7 + $0x80] sm:$0xff]
    %v502 = vld [vmem:[#allocation7 + $0x88] sm:$0xff]
    %v503 = vld [vmem:[#allocation7 + $0x90] sm:$0xff]
    %v504 = vld [vmem:[#allocation7 + $0x98] sm:$0xff]
    %v505 = vld [vmem:[#allocation7 + $0xa0] sm:$0xff]
    %v506 = vld [vmem:[#allocation7 + $0xa8] sm:$0xff]
    %v507 = vld [vmem:[#allocation7 + $0xb0] sm:$0xff]
    %v508 = vld [vmem:[#allocation7 + $0xb8] sm:$0xff]
    %v509 = vld [vmem:[#allocation7 + $0xc0] sm:$0xff]
    %v510 = vld [vmem:[#allocation7 + $0xc8] sm:$0xff]
    %v511 = vld [vmem:[#allocation7 + $0xd0] sm:$0xff]
    %v512 = vld [vmem:[#allocation7 + $0xd8] sm:$0xff]
    %v513 = vld [vmem:[#allocation7 + $0xe0] sm:$0xff]
    %v514 = vld [vmem:[#allocation7 + $0xe8] sm:$0xff]
    %v515 = vld [vmem:[#allocation7 + $0xf0] sm:$0xff]
    %v516 = vld [vmem:[#allocation7 + $0xf8] sm:$0xff]
    %v517 = vld [vmem:[#allocation7 + $0x100] sm:$0xff]
    %v518 = vld [vmem:[#allocation7 + $0x108] sm:$0xff]
    %v519 = vld [vmem:[#allocation7 + $0x110] sm:$0xff]
    %v520 = vld [vmem:[#allocation7 + $0x118] sm:$0xff]
    %v521 = vld [vmem:[#allocation7 + $0x120] sm:$0xff]
    %v522 = vld [vmem:[#allocation7 + $0x128] sm:$0xff]
    %v523 = vld [vmem:[#allocation7 + $0x130] sm:$0xff]
    %v524 = vld [vmem:[#allocation7 + $0x138] sm:$0xff]
    %v533 = vcombine.low %v477, %v478
    %v534 = vcombine.low %v479, %v480
    %v536 = vunpack.c.l.s4 1983009808
    %v537 = vunpack.c.0.s8 %v536
    %v538 = vlaneseq
    %v539 = vshrl.u32 %v538, 7
    %v540 = vsub.s32 %v537, %v539
    %v541 = vrot.slane %v533, %v540
    %v543 = vunpack.c.l.s4 1983009808
    %v544 = vunpack.c.0.s8 %v543
    %v545 = vlaneseq
    %v546 = vshrl.u32 %v545, 7
    %v547 = vsub.s32 %v544, %v546
    %v548 = vrot.slane %v534, %v547
    %v549 = vcombine.low %v541, %v548
    %v550 = vcombine.high %v541, %v548
    %v551 = vcombine.low %v481, %v482
    %v552 = vcombine.low %v483, %v484
    %v554 = vunpack.c.l.s4 1983009808
    %v555 = vunpack.c.0.s8 %v554
    %v556 = vlaneseq
    %v557 = vshrl.u32 %v556, 7
    %v558 = vsub.s32 %v555, %v557
    %v559 = vrot.slane %v551, %v558
    %v561 = vunpack.c.l.s4 1983009808
    %v562 = vunpack.c.0.s8 %v561
    %v563 = vlaneseq
    %v564 = vshrl.u32 %v563, 7
    %v565 = vsub.s32 %v562, %v564
    %v566 = vrot.slane %v552, %v565
    %v567 = vcombine.low %v559, %v566
    %v568 = vcombine.high %v559, %v566
    %vm571 = vcmask 261120
    %v572 = vsel %vm571, %v550, 0
    %v574 = vsel %vm571, %v568, 0
    %576 = vmatprep.subr.mxu0 %v486
    %577 = vmatpush1.msra.mxu0 %v485
    %578 = vmatprep.subr.mxu0 %v488
    %579 = vmatpush1.msra.mxu0 %v487
    %580 = vmatprep.subr.mxu0 %v490
    %581 = vmatpush1.msra.mxu0 %v489
    %582 = vmatprep.subr.mxu0 %v492
    %583 = vmatpush1.msra.mxu0 %v491
    %584 = vmatprep.subr.mxu0 %v494
    %585 = vmatpush1.msra.mxu0 %v493
    %586 = vmatprep.subr.mxu0 %v496
    %587 = vmatpush1.msra.mxu0 %v495
    %588 = vmatprep.subr.mxu0 %v498
    %589 = vmatpush1.msra.mxu0 %v497
    %590 = vmatprep.subr.mxu0 %v500
    %591 = vmatpush1.msra.mxu0 %v499
    %592 = vmatprep.subr.mxu0 %v502
    %593 = vmatpush1.msra.mxu0 %v501
    %594 = vmatprep.subr.mxu0 %v504
    %595 = vmatpush1.msra.mxu0 %v503
    %596 = vmatprep.subr.mxu0 %v506
    %597 = vmatpush1.msra.mxu0 %v505
    %598 = vmatprep.subr.mxu0 %v508
    %599 = vmatpush1.msra.mxu0 %v507
    %600 = vmatprep.subr.mxu0 %v510
    %601 = vmatpush1.msra.mxu0 %v509
    %602 = vmatprep.subr.mxu0 %v512
    %603 = vmatpush1.msra.mxu0 %v511
    %604 = vmatprep.subr.mxu0 %v514
    %605 = vmatpush1.msra.mxu0 %v513
    %606 = vmatprep.subr.mxu0 %v516
    %607 = vmatpush1.msra.mxu0 %v515
    %608 = vmatprep.subr.mxu0 %v518
    %609 = vmatpush1.msra.mxu0 %v517
    %610 = vmatprep.subr.mxu0 %v520
    %611 = vmatpush1.msra.mxu0 %v519
    %612 = vmatprep.subr.mxu0 %v522
    %613 = vmatpush1.msra.mxu0 %v521
    %614 = vmatprep.subr.mxu0 %v524
    %615 = vmatpush1.msra.mxu0 %v523
    %616 = vmatprep.subr.mxu0 0.0
    %617 = vmatpush1.msra.mxu0 0.0
    %618 = vmatprep.subr.mxu0 0.0
    %619 = vmatpush1.msra.mxu0 0.0
    %620 = vmatprep.subr.mxu0 0.0
    %621 = vmatpush1.msra.mxu0 0.0
    %622 = vmatprep.subr.mxu0 0.0
    %623 = vmatpush1.msra.mxu0 0.0
    %624 = vmatprep.subr.mxu0 0.0
    %625 = vmatpush1.msra.mxu0 0.0
    %626 = vmatprep.subr.mxu0 0.0
    %627 = vmatpush1.msra.mxu0 0.0
    %628 = vmatprep.subr.mxu0 0.0
    %629 = vmatpush1.msra.mxu0 0.0
    %630 = vmatprep.subr.mxu0 0.0
    %631 = vmatpush1.msra.mxu0 0.0
    %632 = vmatprep.subr.mxu0 0.0
    %633 = vmatpush1.msra.mxu0 0.0
    %634 = vmatprep.subr.mxu0 0.0
    %635 = vmatpush1.msra.mxu0 0.0
    %636 = vmatprep.subr.mxu0 0.0
    %637 = vmatpush1.msra.mxu0 0.0
    %638 = vmatprep.subr.mxu0 0.0
    %639 = vmatpush1.msra.mxu0 0.0
    %640 = vmatprep.mubr.f32.mxu0 %v572
    %641 = vmatmul.mubr.f32.gmra.mrb[0].mxu0 %v549
    %v642 = vpop.f32.mrb[0].mxu0
    %v643 = vadd.f32 0.0, %v642
    %v644 = vpop.f32.mrb[0].mxu0
    %v645 = vadd.f32 0.0, %v644
    %646 = vmatprep.mubr.f32.mxu0 %v574
    %647 = vmatmul.mubr.f32.gmra.mrb[0].mxu0 %v567
    %v648 = vpop.f32.mrb[0].mxu0
    %v649 = vadd.f32 0.0, %v648
    %v650 = vpop.f32.mrb[0].mxu0
    %v651 = vadd.f32 0.0, %v650
    %652 = vdwg.mxu0
    %v653 = vadd.f32 %v467, %v643
    %v654 = vadd.f32 %v469, %v645
    %v655 = vadd.f32 %v473, %v649
    %v656 = vadd.f32 %v475, %v651
    %v657 = vld [vmem:[%s6] sm:$0x3]
    %v659 = vlaneseq
    %v660 = vshrl.u32 %v659, 7
    %v661 = vsub.s32 0, %v660
    %v662 = vrot.slane %v657, %v661
    %v663 = vlaneseq
    %v664 = vshrl.u32 %v663, 7
    %v665 = vsub.s32 1, %v664
    %v666 = vrot.slane %v657, %v665
    %v669 = vadd.f32 %v653, %v662
    %v670 = vadd.f32 %v654, %v666
    %v671 = vadd.f32 %v655, %v662
    %v672 = vadd.f32 %v656, %v666
    %vm673 = vcmp.gt.f32.partialorder %v669, 0.0
    %vm674 = vcmp.gt.f32.partialorder %v670, 0.0
    %vm675 = vcmp.gt.f32.partialorder %v671, 0.0
    %vm676 = vcmp.gt.f32.partialorder %v672, 0.0
    %v677 = vmul.f32 %v669, 0.3
    %v678 = vmul.f32 %v670, 0.3
    %v679 = vmul.f32 %v671, 0.3
    %v680 = vmul.f32 %v672, 0.3
    %v681 = vsel %vm673, %v669, %v677
    %v682 = vsel %vm674, %v670, %v678
    %v683 = vsel %vm675, %v671, %v679
    %v684 = vsel %vm676, %v672, %v680
    %v685 = vld [vmem:[#allocation8] sm:$0xff]
    %v686 = vld [vmem:[#allocation8 + $0x8] sm:$0xff]
    %v687 = vld [vmem:[#allocation8 + $0x10] sm:$0xff]
    %v688 = vld [vmem:[#allocation8 + $0x18] sm:$0xff]
    %v689 = vld [vmem:[#allocation8 + $0x20] sm:$0xff]
    %v690 = vld [vmem:[#allocation8 + $0x28] sm:$0xff]
    %v691 = vld [vmem:[#allocation8 + $0x30] sm:$0xff]
    %v692 = vld [vmem:[#allocation8 + $0x38] sm:$0xff]
    %v693 = vld [vmem:[#allocation8 + $0x40] sm:$0xff]
    %v694 = vld [vmem:[#allocation8 + $0x48] sm:$0xff]
    %v695 = vld [vmem:[#allocation8 + $0x50] sm:$0xff]
    %v696 = vld [vmem:[#allocation8 + $0x58] sm:$0xff]
    %v697 = vld [vmem:[#allocation8 + $0x60] sm:$0xff]
    %v698 = vld [vmem:[#allocation8 + $0x68] sm:$0xff]
    %v699 = vld [vmem:[#allocation8 + $0x70] sm:$0xff]
    %v700 = vld [vmem:[#allocation8 + $0x78] sm:$0xff]
    %v701 = vld [vmem:[#allocation8 + $0x80] sm:$0xff]
    %v702 = vld [vmem:[#allocation8 + $0x88] sm:$0xff]
    %v703 = vld [vmem:[#allocation8 + $0x90] sm:$0xff]
    %v704 = vld [vmem:[#allocation8 + $0x98] sm:$0xff]
    %v705 = vld [vmem:[#allocation8 + $0xa0] sm:$0xff]
    %v706 = vld [vmem:[#allocation8 + $0xa8] sm:$0xff]
    %v707 = vld [vmem:[#allocation8 + $0xb0] sm:$0xff]
    %v708 = vld [vmem:[#allocation8 + $0xb8] sm:$0xff]
    %v709 = vld [vmem:[#allocation8 + $0xc0] sm:$0xff]
    %v710 = vld [vmem:[#allocation8 + $0xc8] sm:$0xff]
    %v711 = vld [vmem:[#allocation8 + $0xd0] sm:$0xff]
    %v712 = vld [vmem:[#allocation8 + $0xd8] sm:$0xff]
    %v713 = vld [vmem:[#allocation8 + $0xe0] sm:$0xff]
    %v714 = vld [vmem:[#allocation8 + $0xe8] sm:$0xff]
    %v715 = vld [vmem:[#allocation8 + $0xf0] sm:$0xff]
    %v716 = vld [vmem:[#allocation8 + $0xf8] sm:$0xff]
    %v717 = vld [vmem:[%s8] sm:$0x1]
    %v719 = vlaneseq
    %v720 = vshrl.u32 %v719, 7
    %v721 = vsub.s32 0, %v720
    %v722 = vrot.slane %v717, %v721
    %724 = vmatprep.subr.mxu0 0.0
    %725 = vmatpush1.msra.mxu0 %v685
    %726 = vmatprep.subr.mxu0 0.0
    %727 = vmatpush1.msra.mxu0 %v686
    %728 = vmatprep.subr.mxu0 0.0
    %729 = vmatpush1.msra.mxu0 %v687
    %730 = vmatprep.subr.mxu0 0.0
    %731 = vmatpush1.msra.mxu0 %v688
    %732 = vmatprep.subr.mxu0 0.0
    %733 = vmatpush1.msra.mxu0 %v689
    %734 = vmatprep.subr.mxu0 0.0
    %735 = vmatpush1.msra.mxu0 %v690
    %736 = vmatprep.subr.mxu0 0.0
    %737 = vmatpush1.msra.mxu0 %v691
    %738 = vmatprep.subr.mxu0 0.0
    %739 = vmatpush1.msra.mxu0 %v692
    %740 = vmatprep.subr.mxu0 0.0
    %741 = vmatpush1.msra.mxu0 %v693
    %742 = vmatprep.subr.mxu0 0.0
    %743 = vmatpush1.msra.mxu0 %v694
    %744 = vmatprep.subr.mxu0 0.0
    %745 = vmatpush1.msra.mxu0 %v695
    %746 = vmatprep.subr.mxu0 0.0
    %747 = vmatpush1.msra.mxu0 %v696
    %748 = vmatprep.subr.mxu0 0.0
    %749 = vmatpush1.msra.mxu0 %v697
    %750 = vmatprep.subr.mxu0 0.0
    %751 = vmatpush1.msra.mxu0 %v698
    %752 = vmatprep.subr.mxu0 0.0
    %753 = vmatpush1.msra.mxu0 %v699
    %754 = vmatprep.subr.mxu0 0.0
    %755 = vmatpush1.msra.mxu0 %v700
    %756 = vmatprep.subr.mxu0 0.0
    %757 = vmatpush1.msra.mxu0 %v701
    %758 = vmatprep.subr.mxu0 0.0
    %759 = vmatpush1.msra.mxu0 %v702
    %760 = vmatprep.subr.mxu0 0.0
    %761 = vmatpush1.msra.mxu0 %v703
    %762 = vmatprep.subr.mxu0 0.0
    %763 = vmatpush1.msra.mxu0 %v704
    %764 = vmatprep.subr.mxu0 0.0
    %765 = vmatpush1.msra.mxu0 %v705
    %766 = vmatprep.subr.mxu0 0.0
    %767 = vmatpush1.msra.mxu0 %v706
    %768 = vmatprep.subr.mxu0 0.0
    %769 = vmatpush1.msra.mxu0 %v707
    %770 = vmatprep.subr.mxu0 0.0
    %771 = vmatpush1.msra.mxu0 %v708
    %772 = vmatprep.subr.mxu0 0.0
    %773 = vmatpush1.msra.mxu0 %v709
    %774 = vmatprep.subr.mxu0 0.0
    %775 = vmatpush1.msra.mxu0 %v710
    %776 = vmatprep.subr.mxu0 0.0
    %777 = vmatpush1.msra.mxu0 %v711
    %778 = vmatprep.subr.mxu0 0.0
    %779 = vmatpush1.msra.mxu0 %v712
    %780 = vmatprep.subr.mxu0 0.0
    %781 = vmatpush1.msra.mxu0 %v713
    %782 = vmatprep.subr.mxu0 0.0
    %783 = vmatpush1.msra.mxu0 %v714
    %784 = vmatprep.subr.mxu0 0.0
    %785 = vmatpush1.msra.mxu0 %v715
    %786 = vmatprep.subr.mxu0 0.0
    %787 = vmatpush1.msra.mxu0 %v716
    %788 = vmatprep.mubr.f32.mxu0 %v682
    %789 = vmatmul.mubr.f32.gmra.mrb[0].mxu0 %v681
    %v790 = vpop.f32.mrb[0].mxu0
    %v791 = vadd.f32 %v722, %v790
    %v792 = vpop.f32.mrb[0].mxu0
    %793 = vmatprep.mubr.f32.mxu0 %v684
    %794 = vmatmul.mubr.f32.gmra.mrb[0].mxu0 %v683
    %v795 = vpop.f32.mrb[0].mxu0
    %v796 = vadd.f32 %v722, %v795
    %v797 = vpop.f32.mrb[0].mxu0
    %798 = vdwg.mxu0
    %vm799 = vcmp.gt.f32.partialorder %v791, 0.0
    %vm800 = vcmp.gt.f32.partialorder %v796, 0.0
    %v801 = vmul.f32 %v791, 0.3
    %v802 = vmul.f32 %v796, 0.3
    %v803 = vsel %vm799, %v791, %v801
    %v804 = vsel %vm800, %v796, %v802
    %v805 = vld [vmem:[#allocation10] sm:$0xff]
    %v806 = vld [vmem:[#allocation10 + $0x8] sm:$0xff]
    %v807 = vld [vmem:[#allocation10 + $0x10] sm:$0xff]
    %v808 = vld [vmem:[#allocation10 + $0x18] sm:$0xff]
    %v809 = vld [vmem:[#allocation10 + $0x20] sm:$0xff]
    %v810 = vld [vmem:[#allocation10 + $0x28] sm:$0xff]
    %v811 = vld [vmem:[#allocation10 + $0x30] sm:$0xff]
    %v812 = vld [vmem:[#allocation10 + $0x38] sm:$0xff]
    %v813 = vld [vmem:[#allocation10 + $0x40] sm:$0xff]
    %v814 = vld [vmem:[#allocation10 + $0x48] sm:$0xff]
    %v815 = vld [vmem:[#allocation10 + $0x50] sm:$0xff]
    %v816 = vld [vmem:[#allocation10 + $0x58] sm:$0xff]
    %v817 = vld [vmem:[#allocation10 + $0x60] sm:$0xff]
    %v818 = vld [vmem:[#allocation10 + $0x68] sm:$0xff]
    %v819 = vld [vmem:[#allocation10 + $0x70] sm:$0xff]
    %v820 = vld [vmem:[#allocation10 + $0x78] sm:$0xff]
    %v821 = vld [vmem:[%s10] sm:$0x1]
    %v823 = vlaneseq
    %v824 = vshrl.u32 %v823, 7
    %v825 = vsub.s32 0, %v824
    %v826 = vrot.slane %v821, %v825
    %828 = vmatprep.subr.mxu0 0.0
    %829 = vmatpush1.msra.mxu0 %v805
    %830 = vmatprep.subr.mxu0 0.0
    %831 = vmatpush1.msra.mxu0 %v806
    %832 = vmatprep.subr.mxu0 0.0
    %833 = vmatpush1.msra.mxu0 %v807
    %834 = vmatprep.subr.mxu0 0.0
    %835 = vmatpush1.msra.mxu0 %v808
    %836 = vmatprep.subr.mxu0 0.0
    %837 = vmatpush1.msra.mxu0 %v809
    %838 = vmatprep.subr.mxu0 0.0
    %839 = vmatpush1.msra.mxu0 %v810
    %840 = vmatprep.subr.mxu0 0.0
    %841 = vmatpush1.msra.mxu0 %v811
    %842 = vmatprep.subr.mxu0 0.0
    %843 = vmatpush1.msra.mxu0 %v812
    %844 = vmatprep.subr.mxu0 0.0
    %845 = vmatpush1.msra.mxu0 %v813
    %846 = vmatprep.subr.mxu0 0.0
    %847 = vmatpush1.msra.mxu0 %v814
    %848 = vmatprep.subr.mxu0 0.0
    %849 = vmatpush1.msra.mxu0 %v815
    %850 = vmatprep.subr.mxu0 0.0
    %851 = vmatpush1.msra.mxu0 %v816
    %852 = vmatprep.subr.mxu0 0.0
    %853 = vmatpush1.msra.mxu0 %v817
    %854 = vmatprep.subr.mxu0 0.0
    %855 = vmatpush1.msra.mxu0 %v818
    %856 = vmatprep.subr.mxu0 0.0
    %857 = vmatpush1.msra.mxu0 %v819
    %858 = vmatprep.subr.mxu0 0.0
    %859 = vmatpush1.msra.mxu0 %v820
    %860 = vmatprep.subr.mxu0 0.0
    %861 = vmatpush1.msra.mxu0 0.0
    %862 = vmatprep.subr.mxu0 0.0
    %863 = vmatpush1.msra.mxu0 0.0
    %864 = vmatprep.subr.mxu0 0.0
    %865 = vmatpush1.msra.mxu0 0.0
    %866 = vmatprep.subr.mxu0 0.0
    %867 = vmatpush1.msra.mxu0 0.0
    %868 = vmatprep.subr.mxu0 0.0
    %869 = vmatpush1.msra.mxu0 0.0
    %870 = vmatprep.subr.mxu0 0.0
    %871 = vmatpush1.msra.mxu0 0.0
    %872 = vmatprep.subr.mxu0 0.0
    %873 = vmatpush1.msra.mxu0 0.0
    %874 = vmatprep.subr.mxu0 0.0
    %875 = vmatpush1.msra.mxu0 0.0
    %876 = vmatprep.subr.mxu0 0.0
    %877 = vmatpush1.msra.mxu0 0.0
    %878 = vmatprep.subr.mxu0 0.0
    %879 = vmatpush1.msra.mxu0 0.0
    %880 = vmatprep.subr.mxu0 0.0
    %881 = vmatpush1.msra.mxu0 0.0
    %882 = vmatprep.subr.mxu0 0.0
    %883 = vmatpush1.msra.mxu0 0.0
    %884 = vmatprep.subr.mxu0 0.0
    %885 = vmatpush1.msra.mxu0 0.0
    %886 = vmatprep.subr.mxu0 0.0
    %887 = vmatpush1.msra.mxu0 0.0
    %888 = vmatprep.subr.mxu0 0.0
    %889 = vmatpush1.msra.mxu0 0.0
    %890 = vmatprep.subr.mxu0 0.0
    %891 = vmatpush1.msra.mxu0 0.0
    %892 = vmatprep.mubr.f32.mxu0 0.0
    %893 = vmatmul.mubr.f32.gmra.mrb[0].mxu0 %v803
    %v894 = vpop.f32.mrb[0].mxu0
    %v895 = vadd.f32 %v826, %v894
    %v896 = vpop.f32.mrb[0].mxu0
    %897 = vmatprep.mubr.f32.mxu0 0.0
    %898 = vmatmul.mubr.f32.gmra.mrb[0].mxu0 %v804
    %v899 = vpop.f32.mrb[0].mxu0
    %v900 = vadd.f32 %v826, %v899
    %v901 = vpop.f32.mrb[0].mxu0
    %902 = vdwg.mxu0
    %vm903 = vcmp.gt.f32.partialorder %v895, 0.0
    %vm904 = vcmp.gt.f32.partialorder %v900, 0.0
    %v905 = vmul.f32 %v895, 0.3
    %v906 = vmul.f32 %v900, 0.3
    %v907 = vsel %vm903, %v895, %v905
    %v908 = vsel %vm904, %v900, %v906
    %v909 = vld [vmem:[%s11] sm:$0xff]
    %v910 = vld [vmem:[%s11 + $0x8] sm:$0xff]
    %v911 = vld [vmem:[%s11 + $0x10] sm:$0xff]
    %v912 = vld [vmem:[%s11 + $0x18] sm:$0xff]
    %v913 = vld [vmem:[%s11 + $0x20] sm:$0xff]
    %v914 = vld [vmem:[%s11 + $0x28] sm:$0xff]
    %v915 = vld [vmem:[%s11 + $0x30] sm:$0xff]
    %v916 = vld [vmem:[%s11 + $0x38] sm:$0xff]
    %v918 = vsel %vm268, %v907, 0
    %v921 = vsel %vm268, %v908, 0
    %923 = vmatprep.subr.mxu0 0.0
    %924 = vmatpush1.msra.mxu0 %v909
    %925 = vmatprep.subr.mxu0 0.0
    %926 = vmatpush1.msra.mxu0 %v910
    %927 = vmatprep.subr.mxu0 0.0
    %928 = vmatpush1.msra.mxu0 %v911
    %929 = vmatprep.subr.mxu0 0.0
    %930 = vmatpush1.msra.mxu0 %v912
    %931 = vmatprep.subr.mxu0 0.0
    %932 = vmatpush1.msra.mxu0 %v913
    %933 = vmatprep.subr.mxu0 0.0
    %934 = vmatpush1.msra.mxu0 %v914
    %935 = vmatprep.subr.mxu0 0.0
    %936 = vmatpush1.msra.mxu0 %v915
    %937 = vmatprep.subr.mxu0 0.0
    %938 = vmatpush1.msra.mxu0 %v916
    %939 = vmatprep.subr.mxu0 0.0
    %940 = vmatpush1.msra.mxu0 0.0
    %941 = vmatprep.subr.mxu0 0.0
    %942 = vmatpush1.msra.mxu0 0.0
    %943 = vmatprep.subr.mxu0 0.0
    %944 = vmatpush1.msra.mxu0 0.0
    %945 = vmatprep.subr.mxu0 0.0
    %946 = vmatpush1.msra.mxu0 0.0
    %947 = vmatprep.subr.mxu0 0.0
    %948 = vmatpush1.msra.mxu0 0.0
    %949 = vmatprep.subr.mxu0 0.0
    %950 = vmatpush1.msra.mxu0 0.0
    %951 = vmatprep.subr.mxu0 0.0
    %952 = vmatpush1.msra.mxu0 0.0
    %953 = vmatprep.subr.mxu0 0.0
    %954 = vmatpush1.msra.mxu0 0.0
    %955 = vmatprep.subr.mxu0 0.0
    %956 = vmatpush1.msra.mxu0 0.0
    %957 = vmatprep.subr.mxu0 0.0
    %958 = vmatpush1.msra.mxu0 0.0
    %959 = vmatprep.subr.mxu0 0.0
    %960 = vmatpush1.msra.mxu0 0.0
    %961 = vmatprep.subr.mxu0 0.0
    %962 = vmatpush1.msra.mxu0 0.0
    %963 = vmatprep.subr.mxu0 0.0
    %964 = vmatpush1.msra.mxu0 0.0
    %965 = vmatprep.subr.mxu0 0.0
    %966 = vmatpush1.msra.mxu0 0.0
    %967 = vmatprep.subr.mxu0 0.0
    %968 = vmatpush1.msra.mxu0 0.0
    %969 = vmatprep.subr.mxu0 0.0
    %970 = vmatpush1.msra.mxu0 0.0
    %971 = vmatprep.subr.mxu0 0.0
    %972 = vmatpush1.msra.mxu0 0.0
    %973 = vmatprep.subr.mxu0 0.0
    %974 = vmatpush1.msra.mxu0 0.0
    %975 = vmatprep.subr.mxu0 0.0
    %976 = vmatpush1.msra.mxu0 0.0
    %977 = vmatprep.subr.mxu0 0.0
    %978 = vmatpush1.msra.mxu0 0.0
    %979 = vmatprep.subr.mxu0 0.0
    %980 = vmatpush1.msra.mxu0 0.0
    %981 = vmatprep.subr.mxu0 0.0
    %982 = vmatpush1.msra.mxu0 0.0
    %983 = vmatprep.subr.mxu0 0.0
    %984 = vmatpush1.msra.mxu0 0.0
    %985 = vmatprep.subr.mxu0 0.0
    %986 = vmatpush1.msra.mxu0 0.0
    %987 = vmatprep.mubr.f32.mxu0 0.0
    %988 = vmatmul.mubr.f32.gmra.mrb[0].mxu0 %v918
    %v989 = vpop.f32.mrb[0].mxu0
    %v990 = vadd.f32 0.0, %v989
    %v991 = vpop.f32.mrb[0].mxu0
    %992 = vmatprep.mubr.f32.mxu0 0.0
    %993 = vmatmul.mubr.f32.gmra.mrb[0].mxu0 %v921
    %v994 = vpop.f32.mrb[0].mxu0
    %v995 = vadd.f32 0.0, %v994
    %v996 = vpop.f32.mrb[0].mxu0
    %997 = vdwg.mxu0
    %vm998 = vcmask 64512
    %999 = vst.msk [vmem:[#allocation11] sm:$0xff] %vm998, %v990
    %1000 = vst.msk [vmem:[#allocation11 + $0x8] sm:$0xff] %vm998, %v995
    // Predicated region
    $region70: #{baseline2_forward.1} parent=1 // pred_check
      _
    $region71: #{baseline2_forward.1} parent=1 // pred_check_branch
      %1002 = sbr.rel (0) target = $region73
    $region72: #{baseline2_forward.1} parent=1 // pred_region
      %s1004 = ssub.s32 256, 32
      %1005 = vsyncadd [#allocation4], %s1004
      %s1006 = sshll.u32 [#allocation11], 4
      %s1007 = int_to_ptr.vmem [resolvable:$true] %s1006
      %1012 = dma.vmem_to_hbm [thread:$0]  %s1007, 32, %s12, [#allocation4], 32, 32, 2
    $region73: #{baseline2_forward.1} parent=1 // pred_fallthru
      _
    // Predicated region
    $region74: #{baseline2_forward.1} parent=1 // pred_check
      _
    $region75: #{baseline2_forward.1} parent=1 // pred_check_branch
      %1014 = sbr.rel (0) target = $region77
    $region76: #{baseline2_forward.1} parent=1 // pred_region
      %1015 = dma.done [#allocation4], 256
    $region77: #{baseline2_forward.1} parent=1 // pred_fallthru
      _
    %1016 = vsyncpa [#allocation3], 1
    %1017 = vsyncpa [#allocation6], 1
    %1018 = vsyncpa [#allocation9], 1
    %1019 = vsyncpa [#allocation4], 1

</llo_original>
